<compile_context>
chip_gen: v7x
topology: tpu7x:2x2x1
jax: 0.10.0
libtpu: 0.0.40
codegen_flags: <defaults>
</compile_context>

<pallas_src>
import functools

import jax
import jax.numpy as jnp
from jax.experimental import pallas as pl
from jax.experimental.pallas import tpu as pltpu


def _fused_conv_kernel(x_ref, w_ref, b_ref, o_ref, *, W, KH, KW):
    # x_ref: (B*Cin, H*W)           f32  NCHW input, flattened (free reshape)
    # w_ref: (KH*KW, B*C1, B*Cin)   f32  block-diagonal fused tap weights
    # b_ref: (B*C1, 1)              f32  fused bias (conv biases + constant)
    # o_ref: (B*C1, H*W)            f32  full output frame (valid window is
    #                                    the top-left Ho x Wo of each row)
    hw = x_ref.shape[1]
    x = x_ref[...]

    # Bias broadcast hoisted: done exactly once, as the accumulator init.
    acc = jnp.broadcast_to(b_ref[...], o_ref.shape).astype(jnp.float32)

    # 9 taps: each is one XLU lane-rotate of the flat spatial slab.  For valid
    # output positions (h < Ho, w < Wo) there is no row carry, so
    # roll(x, hw - s)[:, h*W + w] == x[:, (h+kh)*W + (w+kw)] with s = kh*W+kw.
    for kh in range(KH):
        for kw in range(KW):
            s = kh * W + kw
            tap = x if s == 0 else pltpu.roll(x, shift=hw - s, axis=1)
            k = kh * KW + kw
            # Block-diagonal weights keep batches independent: one small MXU
            # push per tap, accumulated in f32.
            acc = acc + jnp.dot(w_ref[k], tap,
                                preferred_element_type=jnp.float32)

    o_ref[...] = acc  # lane-dense, fully unmasked store


@jax.jit
def model_forward(x_nchw, w0, b0, w1, b1, const_vec):
    """x_nchw: (B,4,H,W); w0: (8,4,3,3); b0: (8,); w1: (8,8,1,1); b1: (8,)."""
    B, Cin, H, W = x_nchw.shape
    C0, _, KH, KW = w0.shape
    C1 = w1.shape[0]
    Ho, Wo = H - KH + 1, W - KW + 1
    f32 = jnp.float32

    # ---- trace-time algebraic fusion (1x1 conv + constant into the 3x3) ----
    w1m = w1[:, :, 0, 0].astype(f32)                                   # (C1, C0)
    w_fused = jnp.einsum('oihw,po->phwi', w0.astype(f32), w1m)         # (C1,KH,KW,Cin)
    w_taps = w_fused.reshape(C1, KH * KW, Cin).transpose(1, 0, 2)      # (9, C1, Cin)

    # Block-diagonal per-tap weights: W_blk[k, b*C1+i, c*Cin+j] = [b==c]*w_taps[k,i,j]
    eye_b = jnp.eye(B, dtype=f32)
    w_blk = jnp.einsum('bc,kij->kbicj', eye_b, w_taps).reshape(
        KH * KW, B * C1, B * Cin)                                      # (9, B*C1, B*Cin)

    b_fused = w1m @ b0.astype(f32) + b1.astype(f32) + const_vec.astype(f32)  # (C1,)
    b_full = jnp.tile(b_fused, B).reshape(B * C1, 1)                   # (B*C1, 1)

    x2d = x_nchw.astype(f32).reshape(B * Cin, H * W)                   # free reshape

    kernel = functools.partial(_fused_conv_kernel, W=W, KH=KH, KW=KW)

    out2d = pl.pallas_call(
        kernel,
        out_shape=jax.ShapeDtypeStruct((B * C1, H * W), f32),
        grid=(1,),
        in_specs=[
            pl.BlockSpec((B * Cin, H * W), lambda i: (0, 0)),
            pl.BlockSpec((KH * KW, B * C1, B * Cin), lambda i: (0, 0, 0)),
            pl.BlockSpec((B * C1, 1), lambda i: (0, 0)),
        ],
        out_specs=pl.BlockSpec((B * C1, H * W), lambda i: (0, 0)),
        compiler_params=pltpu.CompilerParams(
            dimension_semantics=("arbitrary",)),
    )(x2d, w_blk, b_full)

    # Free reshape to NCHW + tiny wrapper slice of the valid window.
    return out2d.reshape(B, C1, H, W)[:, :, :Ho, :Wo]


def _reference(x_nchw, w0, b0, w1, b1, const_vec):
    """Pure-JAX reference (lax conv) for correctness check."""
    y = jax.lax.conv_general_dilated(
        x_nchw, w0, window_strides=(1, 1), padding="VALID",
        dimension_numbers=("NCHW", "OIHW", "NCHW"))
    y = y + b0[None, :, None, None]
    z = jax.lax.conv_general_dilated(
        y, w1, window_strides=(1, 1), padding="VALID",
        dimension_numbers=("NCHW", "OIHW", "NCHW"))
    z = z + b1[None, :, None, None] + const_vec[None, :, None, None]
    return z


if __name__ == "__main__":
    key = jax.random.PRNGKey(0)
    k_x, k_w0, k_b0, k_w1 = jax.random.split(key, 4)

    B, Cin, H, W = 2, 4, 16, 16
    C0, C1 = 8, 8

    x = jax.random.normal(k_x, (B, Cin, H, W), dtype=jnp.float32)

    # Deterministic parameter init (PyTorch-like uniform bounds).
    fan0 = Cin * 3 * 3
    bound0 = 1.0 / (fan0 ** 0.5)
    w0 = jax.random.uniform(k_w0, (C0, Cin, 3, 3), jnp.float32, -bound0, bound0)
    b0 = jax.random.uniform(k_b0, (C0,), jnp.float32, -bound0, bound0)

    fan1 = C0
    bound1 = 1.0 / (fan1 ** 0.5)
    w1 = jax.random.uniform(k_w1, (C1, C0, 1, 1), jnp.float32, -bound1, bound1)
    b1 = jnp.ones((C1,), jnp.float32)  # intended `bias = ones(8)` from the module

    const_vec = jnp.array([1.0, 2.0, 3.0, 4.0, 5.0, 5.0, 6.0, 7.0], jnp.float32)

    out = model_forward(x, w0, b0, w1, b1, const_vec)
    out = jax.block_until_ready(out)

    ref = _reference(x, w0, b0, w1, b1, const_vec)
    assert out.shape == (B, C1, H - 2, W - 2), out.shape
    assert jnp.allclose(out, ref, atol=1e-4, rtol=1e-4), "mismatch vs reference"

    print("KERNEL_OK")
</pallas_src>

<mosaic_0001>
module attributes {stable_mosaic.version = 11 : i64} {
  func.func @_fused_conv_kernel(%arg0: i32, %arg1: memref<8x256xf32, #tpu.memory_space<vmem>>, %arg2: memref<9x16x8xf32, #tpu.memory_space<vmem>>, %arg3: memref<16x1xf32, #tpu.memory_space<vmem>>, %arg4: memref<16x256xf32, #tpu.memory_space<vmem>>) attributes {dimension_semantics = [#tpu.dimension_semantics<arbitrary>], iteration_bounds = array<i64: 1>, scalar_prefetch = 0 : i64, scratch_operands = 0 : i64, tpu.core_type = #tpu.core_type<tc>, window_params = [{pipeline_mode = #tpu.pipeline_mode<synchronous>, transform_indices = @transform_0, window_bounds = array<i64: 8, 256>}, {pipeline_mode = #tpu.pipeline_mode<synchronous>, transform_indices = @transform_1, window_bounds = array<i64: 9, 16, 8>}, {pipeline_mode = #tpu.pipeline_mode<synchronous>, transform_indices = @transform_2, window_bounds = array<i64: 16, 1>}, {pipeline_mode = #tpu.pipeline_mode<synchronous>, transform_indices = @transform_3, window_bounds = array<i64: 16, 256>}]} {
    %c0 = arith.constant 0 : index
    %c0_0 = arith.constant 0 : index
    %0 = vector.load %arg1[%c0, %c0_0] : memref<8x256xf32, #tpu.memory_space<vmem>>, vector<8x256xf32>
    %c0_1 = arith.constant 0 : index
    %c0_2 = arith.constant 0 : index
    %1 = vector.load %arg3[%c0_1, %c0_2] : memref<16x1xf32, #tpu.memory_space<vmem>>, vector<16x1xf32>
    %2 = vector.shape_cast %1 : vector<16x1xf32> to vector<16x1xf32>
    %3 = vector.broadcast %2 : vector<16x1xf32> to vector<16x256xf32>
    %c0_3 = arith.constant 0 : index
    %c0_4 = arith.constant 0 : index
    %c0_5 = arith.constant 0 : index
    %4 = vector.load %arg2[%c0_3, %c0_4, %c0_5] : memref<9x16x8xf32, #tpu.memory_space<vmem>>, vector<1x16x8xf32>
    %5 = vector.shape_cast %4 : vector<1x16x8xf32> to vector<16x8xf32>
    %cst = arith.constant dense<0.000000e+00> : vector<16x256xf32>
    %6 = tpu.matmul %5, %0, %cst {dimension_numbers = #tpu.dot_dimension_numbers<[1], [0], [0], [1], [0, 0, 1, 1], [], []>} : vector<16x8xf32>, vector<8x256xf32>, vector<16x256xf32> -> vector<16x256xf32>
    %7 = arith.addf %3, %6 : vector<16x256xf32>
    %c255_i32 = arith.constant 255 : i32
    %8 = tpu.dynamic_rotate %0 by %c255_i32 dim 1 : vector<8x256xf32>, i32 -> vector<8x256xf32>
    %c1 = arith.constant 1 : index
    %c0_6 = arith.constant 0 : index
    %c0_7 = arith.constant 0 : index
    %9 = vector.load %arg2[%c1, %c0_6, %c0_7] : memref<9x16x8xf32, #tpu.memory_space<vmem>>, vector<1x16x8xf32>
    %10 = vector.shape_cast %9 : vector<1x16x8xf32> to vector<16x8xf32>
    %cst_8 = arith.constant dense<0.000000e+00> : vector<16x256xf32>
    %11 = tpu.matmul %10, %8, %cst_8 {dimension_numbers = #tpu.dot_dimension_numbers<[1], [0], [0], [1], [0, 0, 1, 1], [], []>} : vector<16x8xf32>, vector<8x256xf32>, vector<16x256xf32> -> vector<16x256xf32>
    %12 = arith.addf %7, %11 : vector<16x256xf32>
    %c254_i32 = arith.constant 254 : i32
    %13 = tpu.dynamic_rotate %0 by %c254_i32 dim 1 : vector<8x256xf32>, i32 -> vector<8x256xf32>
    %c2 = arith.constant 2 : index
    %c0_9 = arith.constant 0 : index
    %c0_10 = arith.constant 0 : index
    %14 = vector.load %arg2[%c2, %c0_9, %c0_10] : memref<9x16x8xf32, #tpu.memory_space<vmem>>, vector<1x16x8xf32>
    %15 = vector.shape_cast %14 : vector<1x16x8xf32> to vector<16x8xf32>
    %cst_11 = arith.constant dense<0.000000e+00> : vector<16x256xf32>
    %16 = tpu.matmul %15, %13, %cst_11 {dimension_numbers = #tpu.dot_dimension_numbers<[1], [0], [0], [1], [0, 0, 1, 1], [], []>} : vector<16x8xf32>, vector<8x256xf32>, vector<16x256xf32> -> vector<16x256xf32>
    %17 = arith.addf %12, %16 : vector<16x256xf32>
    %c240_i32 = arith.constant 240 : i32
    %18 = tpu.dynamic_rotate %0 by %c240_i32 dim 1 : vector<8x256xf32>, i32 -> vector<8x256xf32>
    %c3 = arith.constant 3 : index
    %c0_12 = arith.constant 0 : index
    %c0_13 = arith.constant 0 : index
    %19 = vector.load %arg2[%c3, %c0_12, %c0_13] : memref<9x16x8xf32, #tpu.memory_space<vmem>>, vector<1x16x8xf32>
    %20 = vector.shape_cast %19 : vector<1x16x8xf32> to vector<16x8xf32>
    %cst_14 = arith.constant dense<0.000000e+00> : vector<16x256xf32>
    %21 = tpu.matmul %20, %18, %cst_14 {dimension_numbers = #tpu.dot_dimension_numbers<[1], [0], [0], [1], [0, 0, 1, 1], [], []>} : vector<16x8xf32>, vector<8x256xf32>, vector<16x256xf32> -> vector<16x256xf32>
    %22 = arith.addf %17, %21 : vector<16x256xf32>
    %c239_i32 = arith.constant 239 : i32
    %23 = tpu.dynamic_rotate %0 by %c239_i32 dim 1 : vector<8x256xf32>, i32 -> vector<8x256xf32>
    %c4 = arith.constant 4 : index
    %c0_15 = arith.constant 0 : index
    %c0_16 = arith.constant 0 : index
    %24 = vector.load %arg2[%c4, %c0_15, %c0_16] : memref<9x16x8xf32, #tpu.memory_space<vmem>>, vector<1x16x8xf32>
    %25 = vector.shape_cast %24 : vector<1x16x8xf32> to vector<16x8xf32>
    %cst_17 = arith.constant dense<0.000000e+00> : vector<16x256xf32>
    %26 = tpu.matmul %25, %23, %cst_17 {dimension_numbers = #tpu.dot_dimension_numbers<[1], [0], [0], [1], [0, 0, 1, 1], [], []>} : vector<16x8xf32>, vector<8x256xf32>, vector<16x256xf32> -> vector<16x256xf32>
    %27 = arith.addf %22, %26 : vector<16x256xf32>
    %c238_i32 = arith.constant 238 : i32
    %28 = tpu.dynamic_rotate %0 by %c238_i32 dim 1 : vector<8x256xf32>, i32 -> vector<8x256xf32>
    %c5 = arith.constant 5 : index
    %c0_18 = arith.constant 0 : index
    %c0_19 = arith.constant 0 : index
    %29 = vector.load %arg2[%c5, %c0_18, %c0_19] : memref<9x16x8xf32, #tpu.memory_space<vmem>>, vector<1x16x8xf32>
    %30 = vector.shape_cast %29 : vector<1x16x8xf32> to vector<16x8xf32>
    %cst_20 = arith.constant dense<0.000000e+00> : vector<16x256xf32>
    %31 = tpu.matmul %30, %28, %cst_20 {dimension_numbers = #tpu.dot_dimension_numbers<[1], [0], [0], [1], [0, 0, 1, 1], [], []>} : vector<16x8xf32>, vector<8x256xf32>, vector<16x256xf32> -> vector<16x256xf32>
    %32 = arith.addf %27, %31 : vector<16x256xf32>
    %c224_i32 = arith.constant 224 : i32
    %33 = tpu.dynamic_rotate %0 by %c224_i32 dim 1 : vector<8x256xf32>, i32 -> vector<8x256xf32>
    %c6 = arith.constant 6 : index
    %c0_21 = arith.constant 0 : index
    %c0_22 = arith.constant 0 : index
    %34 = vector.load %arg2[%c6, %c0_21, %c0_22] : memref<9x16x8xf32, #tpu.memory_space<vmem>>, vector<1x16x8xf32>
    %35 = vector.shape_cast %34 : vector<1x16x8xf32> to vector<16x8xf32>
    %cst_23 = arith.constant dense<0.000000e+00> : vector<16x256xf32>
    %36 = tpu.matmul %35, %33, %cst_23 {dimension_numbers = #tpu.dot_dimension_numbers<[1], [0], [0], [1], [0, 0, 1, 1], [], []>} : vector<16x8xf32>, vector<8x256xf32>, vector<16x256xf32> -> vector<16x256xf32>
    %37 = arith.addf %32, %36 : vector<16x256xf32>
    %c223_i32 = arith.constant 223 : i32
    %38 = tpu.dynamic_rotate %0 by %c223_i32 dim 1 : vector<8x256xf32>, i32 -> vector<8x256xf32>
    %c7 = arith.constant 7 : index
    %c0_24 = arith.constant 0 : index
    %c0_25 = arith.constant 0 : index
    %39 = vector.load %arg2[%c7, %c0_24, %c0_25] : memref<9x16x8xf32, #tpu.memory_space<vmem>>, vector<1x16x8xf32>
    %40 = vector.shape_cast %39 : vector<1x16x8xf32> to vector<16x8xf32>
    %cst_26 = arith.constant dense<0.000000e+00> : vector<16x256xf32>
    %41 = tpu.matmul %40, %38, %cst_26 {dimension_numbers = #tpu.dot_dimension_numbers<[1], [0], [0], [1], [0, 0, 1, 1], [], []>} : vector<16x8xf32>, vector<8x256xf32>, vector<16x256xf32> -> vector<16x256xf32>
    %42 = arith.addf %37, %41 : vector<16x256xf32>
    %c222_i32 = arith.constant 222 : i32
    %43 = tpu.dynamic_rotate %0 by %c222_i32 dim 1 : vector<8x256xf32>, i32 -> vector<8x256xf32>
    %c8 = arith.constant 8 : index
    %c0_27 = arith.constant 0 : index
    %c0_28 = arith.constant 0 : index
    %44 = vector.load %arg2[%c8, %c0_27, %c0_28] : memref<9x16x8xf32, #tpu.memory_space<vmem>>, vector<1x16x8xf32>
    %45 = vector.shape_cast %44 : vector<1x16x8xf32> to vector<16x8xf32>
    %cst_29 = arith.constant dense<0.000000e+00> : vector<16x256xf32>
    %46 = tpu.matmul %45, %43, %cst_29 {dimension_numbers = #tpu.dot_dimension_numbers<[1], [0], [0], [1], [0, 0, 1, 1], [], []>} : vector<16x8xf32>, vector<8x256xf32>, vector<16x256xf32> -> vector<16x256xf32>
    %47 = arith.addf %42, %46 : vector<16x256xf32>
    %c0_30 = arith.constant 0 : index
    %c0_31 = arith.constant 0 : index
    %48 = vector.load %arg4[%c0_30, %c0_31] : memref<16x256xf32, #tpu.memory_space<vmem>>, vector<16x256xf32>
    tpu.vector_store %arg4[%c0_30, %c0_31], %47 {strides = array<i32>} : memref<16x256xf32, #tpu.memory_space<vmem>>, vector<16x256xf32>,
    return
  }
  func.func @transform_0(%arg0: i32) -> (i32, i32) {
    %c0_i32 = arith.constant 0 : i32
    %c0_i32_0 = arith.constant 0 : i32
    %c0_i32_1 = arith.constant 0 : i32
    return %c0_i32, %c0_i32_0 : i32, i32
  }
  func.func @transform_1(%arg0: i32) -> (i32, i32, i32) {
    %c0_i32 = arith.constant 0 : i32
    %c0_i32_0 = arith.constant 0 : i32
    %c0_i32_1 = arith.constant 0 : i32
    %c0_i32_2 = arith.constant 0 : i32
    return %c0_i32, %c0_i32_0, %c0_i32_1 : i32, i32, i32
  }
  func.func @transform_2(%arg0: i32) -> (i32, i32) {
    %c0_i32 = arith.constant 0 : i32
    %c0_i32_0 = arith.constant 0 : i32
    %c0_i32_1 = arith.constant 0 : i32
    return %c0_i32, %c0_i32_0 : i32, i32
  }
  func.func @transform_3(%arg0: i32) -> (i32, i32) {
    %c0_i32 = arith.constant 0 : i32
    %c0_i32_0 = arith.constant 0 : i32
    %c0_i32_1 = arith.constant 0 : i32
    return %c0_i32, %c0_i32_0 : i32, i32
  }
}

</mosaic_0001>

<llo_original>
// kernel: tile.8
$region0: #{tile.8}
  #allocation0 [shape = 's32[1]{0}', space=sflag, size = 0x4, scoped, tag = 'scoped memory for tile.8']
  %s0 = inlined_call_operand.vmem [shape: f32[8], index: 0, kind: input, shape index: {}]
  %s1 = inlined_call_operand.vmem [shape: f32[2,8], index: 1, kind: output, shape index: {}]
  // Predicated region
  $region2: #{tile.8} parent=0 // pred_check
    _
  $region3: #{tile.8} parent=0 // pred_check_branch
    %3 = sbr.rel (0) target = $region5
  $region4: #{tile.8} parent=0 // pred_region
    _
  $region5: #{tile.8} parent=0 // pred_fallthru
    _
  %v4 = vld [vmem:[%s0] ss:$0 sm:$0xff]
  %5 = vst [vmem:[%s1] sm:$0x3] %v4

// kernel: tile.0
$region0: #{tile.0}
  %s0 = inlined_call_operand.vmem [shape: f32[2,8], index: 0, kind: input, shape index: {}]
  %s1 = inlined_call_operand.vmem [shape: f32[16,1], index: 1, kind: output, shape index: {}]
  $region1: #{tile.0} parent=0
    #allocation0 [shape = 'u8[4096]{0}', space=vmem, size = 0x1000, scoped, tag = 'scoped mem for input reshape']
    %s3 = sshllo.u32 0, 2
    %v4 = vld [vmem:[%s0] sm:%s3]
    %5 = vst [vmem:[#allocation0] sm:%s3] %v4
    %v6 = vld [vmem:[#allocation0] sm:$0x3]
    %vm7 = vcmask 7168
    %8 = vst.msk [vmem:[%s1] ss:$8 sm:$0x3] %vm7, %v6
    %v9 = vld [vmem:[#allocation0] sm:$0x3]
    %10 = vrot.lane.b32.xlu0 %v9, 127
    %v11 = vpop.permute.xlu0 %10
    %vm12 = vcmask 7168
    %s13 = scalar_lea.vmem %s1, 1
    %14 = vst.msk [vmem:[%s13] ss:$8 sm:$0x3] %vm12, %v11
    %v15 = vld [vmem:[#allocation0] sm:$0x3]
    %16 = vrot.lane.b32.xlu0 %v15, 126
    %v17 = vpop.permute.xlu0 %16
    %vm18 = vcmask 7168
    %s19 = scalar_lea.vmem %s1, 2
    %20 = vst.msk [vmem:[%s19] ss:$8 sm:$0x3] %vm18, %v17
    %v21 = vld [vmem:[#allocation0] sm:$0x3]
    %22 = vrot.lane.b32.xlu0 %v21, 125
    %v23 = vpop.permute.xlu0 %22
    %vm24 = vcmask 7168
    %s25 = scalar_lea.vmem %s1, 3
    %26 = vst.msk [vmem:[%s25] ss:$8 sm:$0x3] %vm24, %v23
    %v27 = vld [vmem:[#allocation0] sm:$0x3]
    %28 = vrot.lane.b32.xlu0 %v27, 124
    %v29 = vpop.permute.xlu0 %28
    %vm30 = vcmask 7168
    %s31 = scalar_lea.vmem %s1, 4
    %32 = vst.msk [vmem:[%s31] ss:$8 sm:$0x3] %vm30, %v29
    %v33 = vld [vmem:[#allocation0] sm:$0x3]
    %34 = vrot.lane.b32.xlu0 %v33, 123
    %v35 = vpop.permute.xlu0 %34
    %vm36 = vcmask 7168
    %s37 = scalar_lea.vmem %s1, 5
    %38 = vst.msk [vmem:[%s37] ss:$8 sm:$0x3] %vm36, %v35
    %v39 = vld [vmem:[#allocation0] sm:$0x3]
    %40 = vrot.lane.b32.xlu0 %v39, 122
    %v41 = vpop.permute.xlu0 %40
    %vm42 = vcmask 7168
    %s43 = scalar_lea.vmem %s1, 6
    %44 = vst.msk [vmem:[%s43] ss:$8 sm:$0x3] %vm42, %v41
    %v45 = vld [vmem:[#allocation0] sm:$0x3]
    %46 = vrot.lane.b32.xlu0 %v45, 121
    %v47 = vpop.permute.xlu0 %46
    %vm48 = vcmask 7168
    %s49 = scalar_lea.vmem %s1, 7
    %50 = vst.msk [vmem:[%s49] ss:$8 sm:$0x3] %vm48, %v47

// kernel: model_forward.1
$region0: #{model_forward.1}
  #allocation0 [shape = 'u32[]', space=smem, size = 0x4, offset = 0x4, fixed_abs, tag = 'smem constant byte address 0x4 - core index']
  #allocation1 [shape = 'u32[144,128]{1,0:T(1,128)}', space=vmem, size = 0x12000, scoped, tag = 'internal scratch']
  %s0 = inlined_call_operand.vmem [shape: f32[8,256], index: 0, kind: input, shape index: {}]
  %s1 = inlined_call_operand.vmem [shape: f32[9,16,8], index: 1, kind: input, shape index: {}]
  %s2 = inlined_call_operand.vmem [shape: f32[16,1], index: 2, kind: input, shape index: {}]
  %s3 = inlined_call_operand.vmem [shape: f32[16,256], index: 3, kind: output, shape index: {}]
  %s4 = sld [smem:[#allocation0]]
  $region22: #{model_forward.1} parent=0
    _
  %s6 = ssub.s32 1, %s4
  %s7 = scalar_select 0, %s6, %s4
  // Predicated region
  $region2: #{model_forward.1} parent=0 // pred_check
    _
  $region3: #{model_forward.1} parent=0 // pred_check_branch
    %9 = sbr.rel (0) target = $region5
  $region4: #{model_forward.1} parent=0 // pred_region
    _
  $region5: #{model_forward.1} parent=0 // pred_fallthru
    _
  // Predicated region
  $region6: #{model_forward.1} parent=0 // pred_check
    _
  $region7: #{model_forward.1} parent=0 // pred_check_branch
    %11 = sbr.rel (0) target = $region9
  $region8: #{model_forward.1} parent=0 // pred_region
    _
  $region9: #{model_forward.1} parent=0 // pred_fallthru
    _
  // Predicated region
  $region10: #{model_forward.1} parent=0 // pred_check
    _
  $region11: #{model_forward.1} parent=0 // pred_check_branch
    %13 = sbr.rel (0) target = $region13
  $region12: #{model_forward.1} parent=0 // pred_region
    _
  $region13: #{model_forward.1} parent=0 // pred_fallthru
    _
  %v14 = vld [vmem:[%s0] sm:$0xff]
  %v15 = vld [vmem:[%s0 + $0x8] sm:$0xff]
  %v16 = vld [vmem:[%s2] sm:$0xff]
  %v17 = vld [vmem:[%s2 + $0x8] sm:$0xff]
  %19 = vset.pattern.permute.xlu0 0
  %20 = vperm.xlu0 %19, %v16
  %v21 = vpop.permute.xlu0 %20
  %24 = vset.pattern.permute.xlu0 0
  %25 = vperm.xlu0 %24, %v17
  %v26 = vpop.permute.xlu0 %25
  %v28 = vld [vmem:[%s1] sm:$0xff]
  %v29 = vld [vmem:[%s1 + $0x8] sm:$0xff]
  %vm30 = vcmask 64512
  %v32 = vsel %vm30, %v28, 0
  %v35 = vsel %vm30, %v29, 0
  %37 = vmatprep.subr.mxu0 %v15
  %38 = vmatpush1.msra.mxu0 %v14
  %39 = vmatprep.subr.mxu0 0.0
  %40 = vmatpush1.msra.mxu0 0.0
  %41 = vmatprep.subr.mxu0 0.0
  %42 = vmatpush1.msra.mxu0 0.0
  %43 = vmatprep.subr.mxu0 0.0
  %44 = vmatpush1.msra.mxu0 0.0
  %45 = vmatprep.subr.mxu0 0.0
  %46 = vmatpush1.msra.mxu0 0.0
  %47 = vmatprep.subr.mxu0 0.0
  %48 = vmatpush1.msra.mxu0 0.0
  %49 = vmatprep.subr.mxu0 0.0
  %50 = vmatpush1.msra.mxu0 0.0
  %51 = vmatprep.subr.mxu0 0.0
  %52 = vmatpush1.msra.mxu0 0.0
  %53 = vmatprep.subr.mxu0 0.0
  %54 = vmatpush1.msra.mxu0 0.0
  %55 = vmatprep.subr.mxu0 0.0
  %56 = vmatpush1.msra.mxu0 0.0
  %57 = vmatprep.subr.mxu0 0.0
  %58 = vmatpush1.msra.mxu0 0.0
  %59 = vmatprep.subr.mxu0 0.0
  %60 = vmatpush1.msra.mxu0 0.0
  %61 = vmatprep.subr.mxu0 0.0
  %62 = vmatpush1.msra.mxu0 0.0
  %63 = vmatprep.subr.mxu0 0.0
  %64 = vmatpush1.msra.mxu0 0.0
  %65 = vmatprep.subr.mxu0 0.0
  %66 = vmatpush1.msra.mxu0 0.0
  %67 = vmatprep.subr.mxu0 0.0
  %68 = vmatpush1.msra.mxu0 0.0
  %69 = vmatprep.subr.mxu0 0.0
  %70 = vmatpush1.msra.mxu0 0.0
  %71 = vmatprep.subr.mxu0 0.0
  %72 = vmatpush1.msra.mxu0 0.0
  %73 = vmatprep.subr.mxu0 0.0
  %74 = vmatpush1.msra.mxu0 0.0
  %75 = vmatprep.subr.mxu0 0.0
  %76 = vmatpush1.msra.mxu0 0.0
  %77 = vmatprep.subr.mxu0 0.0
  %78 = vmatpush1.msra.mxu0 0.0
  %79 = vmatprep.subr.mxu0 0.0
  %80 = vmatpush1.msra.mxu0 0.0
  %81 = vmatprep.subr.mxu0 0.0
  %82 = vmatpush1.msra.mxu0 0.0
  %83 = vmatprep.subr.mxu0 0.0
  %84 = vmatpush1.msra.mxu0 0.0
  %85 = vmatprep.subr.mxu0 0.0
  %86 = vmatpush1.msra.mxu0 0.0
  %87 = vmatprep.subr.mxu0 0.0
  %88 = vmatpush1.msra.mxu0 0.0
  %89 = vmatprep.subr.mxu0 0.0
  %90 = vmatpush1.msra.mxu0 0.0
  %91 = vmatprep.subr.mxu0 0.0
  %92 = vmatpush1.msra.mxu0 0.0
  %93 = vmatprep.subr.mxu0 0.0
  %94 = vmatpush1.msra.mxu0 0.0
  %95 = vmatprep.subr.mxu0 0.0
  %96 = vmatpush1.msra.mxu0 0.0
  %97 = vmatprep.subr.mxu0 0.0
  %98 = vmatpush1.msra.mxu0 0.0
  %99 = vmatprep.subr.mxu0 0.0
  %100 = vmatpush1.msra.mxu0 0.0
  %101 = vmatprep.mubr.f32.mxu0 0.0
  %102 = vmatmul.mubr.f32.gmra.mrb[0].mxu0 %v32
  %v103 = vpop.f32.mrb[0].mxu0
  %v104 = vadd.f32 0.0, %v103
  %v105 = vpop.f32.mrb[0].mxu0
  %v106 = vadd.f32 0.0, %v105
  %107 = vmatprep.mubr.f32.mxu0 0.0
  %108 = vmatmul.mubr.f32.gmra.mrb[0].mxu0 %v35
  %v109 = vpop.f32.mrb[0].mxu0
  %v110 = vadd.f32 0.0, %v109
  %v111 = vpop.f32.mrb[0].mxu0
  %v112 = vadd.f32 0.0, %v111
  %113 = vdwg.mxu0
  %v114 = vadd.f32 %v21, %v104
  %v115 = vadd.f32 %v21, %v106
  %v116 = vadd.f32 %v26, %v110
  %v117 = vadd.f32 %v26, %v112
  %118 = vrot.lane.b32.xlu0 %v14, 127
  %v119 = vpop.permute.xlu0 %118
  %120 = vrot.lane.b32.xlu0 %v15, 127
  %v121 = vpop.permute.xlu0 %120
  %v122 = vlaneseq
  %v123 = vand.u32 %v122, 127
  %vm124 = vcmp.lt.s32.totalorder %v123, 127
  %v125 = vsel %vm124, %v119, %v121
  %v126 = vsel %vm124, %v121, %v119
  %s127 = scalar_lea.vmem %s1, 16
  %v128 = vld [vmem:[%s127] sm:$0xff]
  %v129 = vld [vmem:[%s127 + $0x8] sm:$0xff]
  %v131 = vsel %vm30, %v128, 0
  %v134 = vsel %vm30, %v129, 0
  %136 = vmatprep.subr.mxu0 %v126
  %137 = vmatpush1.msra.mxu0 %v125
  %138 = vmatprep.subr.mxu0 0.0
  %139 = vmatpush1.msra.mxu0 0.0
  %140 = vmatprep.subr.mxu0 0.0
  %141 = vmatpush1.msra.mxu0 0.0
  %142 = vmatprep.subr.mxu0 0.0
  %143 = vmatpush1.msra.mxu0 0.0
  %144 = vmatprep.subr.mxu0 0.0
  %145 = vmatpush1.msra.mxu0 0.0
  %146 = vmatprep.subr.mxu0 0.0
  %147 = vmatpush1.msra.mxu0 0.0
  %148 = vmatprep.subr.mxu0 0.0
  %149 = vmatpush1.msra.mxu0 0.0
  %150 = vmatprep.subr.mxu0 0.0
  %151 = vmatpush1.msra.mxu0 0.0
  %152 = vmatprep.subr.mxu0 0.0
  %153 = vmatpush1.msra.mxu0 0.0
  %154 = vmatprep.subr.mxu0 0.0
  %155 = vmatpush1.msra.mxu0 0.0
  %156 = vmatprep.subr.mxu0 0.0
  %157 = vmatpush1.msra.mxu0 0.0
  %158 = vmatprep.subr.mxu0 0.0
  %159 = vmatpush1.msra.mxu0 0.0
  %160 = vmatprep.subr.mxu0 0.0
  %161 = vmatpush1.msra.mxu0 0.0
  %162 = vmatprep.subr.mxu0 0.0
  %163 = vmatpush1.msra.mxu0 0.0
  %164 = vmatprep.subr.mxu0 0.0
  %165 = vmatpush1.msra.mxu0 0.0
  %166 = vmatprep.subr.mxu0 0.0
  %167 = vmatpush1.msra.mxu0 0.0
  %168 = vmatprep.subr.mxu0 0.0
  %169 = vmatpush1.msra.mxu0 0.0
  %170 = vmatprep.subr.mxu0 0.0
  %171 = vmatpush1.msra.mxu0 0.0
  %172 = vmatprep.subr.mxu0 0.0
  %173 = vmatpush1.msra.mxu0 0.0
  %174 = vmatprep.subr.mxu0 0.0
  %175 = vmatpush1.msra.mxu0 0.0
  %176 = vmatprep.subr.mxu0 0.0
  %177 = vmatpush1.msra.mxu0 0.0
  %178 = vmatprep.subr.mxu0 0.0
  %179 = vmatpush1.msra.mxu0 0.0
  %180 = vmatprep.subr.mxu0 0.0
  %181 = vmatpush1.msra.mxu0 0.0
  %182 = vmatprep.subr.mxu0 0.0
  %183 = vmatpush1.msra.mxu0 0.0
  %184 = vmatprep.subr.mxu0 0.0
  %185 = vmatpush1.msra.mxu0 0.0
  %186 = vmatprep.subr.mxu0 0.0
  %187 = vmatpush1.msra.mxu0 0.0
  %188 = vmatprep.subr.mxu0 0.0
  %189 = vmatpush1.msra.mxu0 0.0
  %190 = vmatprep.subr.mxu0 0.0
  %191 = vmatpush1.msra.mxu0 0.0
  %192 = vmatprep.subr.mxu0 0.0
  %193 = vmatpush1.msra.mxu0 0.0
  %194 = vmatprep.subr.mxu0 0.0
  %195 = vmatpush1.msra.mxu0 0.0
  %196 = vmatprep.subr.mxu0 0.0
  %197 = vmatpush1.msra.mxu0 0.0
  %198 = vmatprep.subr.mxu0 0.0
  %199 = vmatpush1.msra.mxu0 0.0
  %200 = vmatprep.mubr.f32.mxu0 0.0
  %201 = vmatmul.mubr.f32.gmra.mrb[0].mxu0 %v131
  %v202 = vpop.f32.mrb[0].mxu0
  %v203 = vadd.f32 0.0, %v202
  %v204 = vpop.f32.mrb[0].mxu0
  %v205 = vadd.f32 0.0, %v204
  %206 = vmatprep.mubr.f32.mxu0 0.0
  %207 = vmatmul.mubr.f32.gmra.mrb[0].mxu0 %v134
  %v208 = vpop.f32.mrb[0].mxu0
  %v209 = vadd.f32 0.0, %v208
  %v210 = vpop.f32.mrb[0].mxu0
  %v211 = vadd.f32 0.0, %v210
  %212 = vdwg.mxu0
  %v213 = vadd.f32 %v114, %v203
  %v214 = vadd.f32 %v115, %v205
  %v215 = vadd.f32 %v116, %v209
  %v216 = vadd.f32 %v117, %v211
  %217 = vrot.lane.b32.xlu0 %v14, 126
  %v218 = vpop.permute.xlu0 %217
  %219 = vrot.lane.b32.xlu0 %v15, 126
  %v220 = vpop.permute.xlu0 %219
  %vm221 = vcmp.lt.s32.totalorder %v123, 126
  %v222 = vsel %vm221, %v218, %v220
  %v223 = vsel %vm221, %v220, %v218
  %s224 = scalar_lea.vmem %s1, 32
  %v225 = vld [vmem:[%s224] sm:$0xff]
  %v226 = vld [vmem:[%s224 + $0x8] sm:$0xff]
  %v228 = vsel %vm30, %v225, 0
  %v231 = vsel %vm30, %v226, 0
  %233 = vmatprep.subr.mxu0 %v223
  %234 = vmatpush1.msra.mxu0 %v222
  %235 = vmatprep.subr.mxu0 0.0
  %236 = vmatpush1.msra.mxu0 0.0
  %237 = vmatprep.subr.mxu0 0.0
  %238 = vmatpush1.msra.mxu0 0.0
  %239 = vmatprep.subr.mxu0 0.0
  %240 = vmatpush1.msra.mxu0 0.0
  %241 = vmatprep.subr.mxu0 0.0
  %242 = vmatpush1.msra.mxu0 0.0
  %243 = vmatprep.subr.mxu0 0.0
  %244 = vmatpush1.msra.mxu0 0.0
  %245 = vmatprep.subr.mxu0 0.0
  %246 = vmatpush1.msra.mxu0 0.0
  %247 = vmatprep.subr.mxu0 0.0
  %248 = vmatpush1.msra.mxu0 0.0
  %249 = vmatprep.subr.mxu0 0.0
  %250 = vmatpush1.msra.mxu0 0.0
  %251 = vmatprep.subr.mxu0 0.0
  %252 = vmatpush1.msra.mxu0 0.0
  %253 = vmatprep.subr.mxu0 0.0
  %254 = vmatpush1.msra.mxu0 0.0
  %255 = vmatprep.subr.mxu0 0.0
  %256 = vmatpush1.msra.mxu0 0.0
  %257 = vmatprep.subr.mxu0 0.0
  %258 = vmatpush1.msra.mxu0 0.0
  %259 = vmatprep.subr.mxu0 0.0
  %260 = vmatpush1.msra.mxu0 0.0
  %261 = vmatprep.subr.mxu0 0.0
  %262 = vmatpush1.msra.mxu0 0.0
  %263 = vmatprep.subr.mxu0 0.0
  %264 = vmatpush1.msra.mxu0 0.0
  %265 = vmatprep.subr.mxu0 0.0
  %266 = vmatpush1.msra.mxu0 0.0
  %267 = vmatprep.subr.mxu0 0.0
  %268 = vmatpush1.msra.mxu0 0.0
  %269 = vmatprep.subr.mxu0 0.0
  %270 = vmatpush1.msra.mxu0 0.0
  %271 = vmatprep.subr.mxu0 0.0
  %272 = vmatpush1.msra.mxu0 0.0
  %273 = vmatprep.subr.mxu0 0.0
  %274 = vmatpush1.msra.mxu0 0.0
  %275 = vmatprep.subr.mxu0 0.0
  %276 = vmatpush1.msra.mxu0 0.0
  %277 = vmatprep.subr.mxu0 0.0
  %278 = vmatpush1.msra.mxu0 0.0
  %279 = vmatprep.subr.mxu0 0.0
  %280 = vmatpush1.msra.mxu0 0.0
  %281 = vmatprep.subr.mxu0 0.0
  %282 = vmatpush1.msra.mxu0 0.0
  %283 = vmatprep.subr.mxu0 0.0
  %284 = vmatpush1.msra.mxu0 0.0
  %285 = vmatprep.subr.mxu0 0.0
  %286 = vmatpush1.msra.mxu0 0.0
  %287 = vmatprep.subr.mxu0 0.0
  %288 = vmatpush1.msra.mxu0 0.0
  %289 = vmatprep.subr.mxu0 0.0
  %290 = vmatpush1.msra.mxu0 0.0
  %291 = vmatprep.subr.mxu0 0.0
  %292 = vmatpush1.msra.mxu0 0.0
  %293 = vmatprep.subr.mxu0 0.0
  %294 = vmatpush1.msra.mxu0 0.0
  %295 = vmatprep.subr.mxu0 0.0
  %296 = vmatpush1.msra.mxu0 0.0
  %297 = vmatprep.mubr.f32.mxu0 0.0
  %298 = vmatmul.mubr.f32.gmra.mrb[0].mxu0 %v228
  %v299 = vpop.f32.mrb[0].mxu0
  %v300 = vadd.f32 0.0, %v299
  %v301 = vpop.f32.mrb[0].mxu0
  %v302 = vadd.f32 0.0, %v301
  %303 = vmatprep.mubr.f32.mxu0 0.0
  %304 = vmatmul.mubr.f32.gmra.mrb[0].mxu0 %v231
  %v305 = vpop.f32.mrb[0].mxu0
  %v306 = vadd.f32 0.0, %v305
  %v307 = vpop.f32.mrb[0].mxu0
  %v308 = vadd.f32 0.0, %v307
  %309 = vdwg.mxu0
  %v310 = vadd.f32 %v213, %v300
  %v311 = vadd.f32 %v214, %v302
  %v312 = vadd.f32 %v215, %v306
  %v313 = vadd.f32 %v216, %v308
  %314 = vrot.lane.b32.xlu0 %v14, 112
  %v315 = vpop.permute.xlu0 %314
  %316 = vrot.lane.b32.xlu0 %v15, 112
  %v317 = vpop.permute.xlu0 %316
  %vm318 = vcmp.lt.s32.totalorder %v123, 112
  %v319 = vsel %vm318, %v315, %v317
  %v320 = vsel %vm318, %v317, %v315
  %s321 = scalar_lea.vmem %s1, 48
  %v322 = vld [vmem:[%s321] sm:$0xff]
  %v323 = vld [vmem:[%s321 + $0x8] sm:$0xff]
  %v325 = vsel %vm30, %v322, 0
  %v328 = vsel %vm30, %v323, 0
  %330 = vmatprep.subr.mxu0 %v320
  %331 = vmatpush1.msra.mxu0 %v319
  %332 = vmatprep.subr.mxu0 0.0
  %333 = vmatpush1.msra.mxu0 0.0
  %334 = vmatprep.subr.mxu0 0.0
  %335 = vmatpush1.msra.mxu0 0.0
  %336 = vmatprep.subr.mxu0 0.0
  %337 = vmatpush1.msra.mxu0 0.0
  %338 = vmatprep.subr.mxu0 0.0
  %339 = vmatpush1.msra.mxu0 0.0
  %340 = vmatprep.subr.mxu0 0.0
  %341 = vmatpush1.msra.mxu0 0.0
  %342 = vmatprep.subr.mxu0 0.0
  %343 = vmatpush1.msra.mxu0 0.0
  %344 = vmatprep.subr.mxu0 0.0
  %345 = vmatpush1.msra.mxu0 0.0
  %346 = vmatprep.subr.mxu0 0.0
  %347 = vmatpush1.msra.mxu0 0.0
  %348 = vmatprep.subr.mxu0 0.0
  %349 = vmatpush1.msra.mxu0 0.0
  %350 = vmatprep.subr.mxu0 0.0
  %351 = vmatpush1.msra.mxu0 0.0
  %352 = vmatprep.subr.mxu0 0.0
  %353 = vmatpush1.msra.mxu0 0.0
  %354 = vmatprep.subr.mxu0 0.0
  %355 = vmatpush1.msra.mxu0 0.0
  %356 = vmatprep.subr.mxu0 0.0
  %357 = vmatpush1.msra.mxu0 0.0
  %358 = vmatprep.subr.mxu0 0.0
  %359 = vmatpush1.msra.mxu0 0.0
  %360 = vmatprep.subr.mxu0 0.0
  %361 = vmatpush1.msra.mxu0 0.0
  %362 = vmatprep.subr.mxu0 0.0
  %363 = vmatpush1.msra.mxu0 0.0
  %364 = vmatprep.subr.mxu0 0.0
  %365 = vmatpush1.msra.mxu0 0.0
  %366 = vmatprep.subr.mxu0 0.0
  %367 = vmatpush1.msra.mxu0 0.0
  %368 = vmatprep.subr.mxu0 0.0
  %369 = vmatpush1.msra.mxu0 0.0
  %370 = vmatprep.subr.mxu0 0.0
  %371 = vmatpush1.msra.mxu0 0.0
  %372 = vmatprep.subr.mxu0 0.0
  %373 = vmatpush1.msra.mxu0 0.0
  %374 = vmatprep.subr.mxu0 0.0
  %375 = vmatpush1.msra.mxu0 0.0
  %376 = vmatprep.subr.mxu0 0.0
  %377 = vmatpush1.msra.mxu0 0.0
  %378 = vmatprep.subr.mxu0 0.0
  %379 = vmatpush1.msra.mxu0 0.0
  %380 = vmatprep.subr.mxu0 0.0
  %381 = vmatpush1.msra.mxu0 0.0
  %382 = vmatprep.subr.mxu0 0.0
  %383 = vmatpush1.msra.mxu0 0.0
  %384 = vmatprep.subr.mxu0 0.0
  %385 = vmatpush1.msra.mxu0 0.0
  %386 = vmatprep.subr.mxu0 0.0
  %387 = vmatpush1.msra.mxu0 0.0
  %388 = vmatprep.subr.mxu0 0.0
  %389 = vmatpush1.msra.mxu0 0.0
  %390 = vmatprep.subr.mxu0 0.0
  %391 = vmatpush1.msra.mxu0 0.0
  %392 = vmatprep.subr.mxu0 0.0
  %393 = vmatpush1.msra.mxu0 0.0
  %394 = vmatprep.mubr.f32.mxu0 0.0
  %395 = vmatmul.mubr.f32.gmra.mrb[0].mxu0 %v325
  %v396 = vpop.f32.mrb[0].mxu0
  %v397 = vadd.f32 0.0, %v396
  %v398 = vpop.f32.mrb[0].mxu0
  %v399 = vadd.f32 0.0, %v398
  %400 = vmatprep.mubr.f32.mxu0 0.0
  %401 = vmatmul.mubr.f32.gmra.mrb[0].mxu0 %v328
  %v402 = vpop.f32.mrb[0].mxu0
  %v403 = vadd.f32 0.0, %v402
  %v404 = vpop.f32.mrb[0].mxu0
  %v405 = vadd.f32 0.0, %v404
  %406 = vdwg.mxu0
  %v407 = vadd.f32 %v310, %v397
  %v408 = vadd.f32 %v311, %v399
  %v409 = vadd.f32 %v312, %v403
  %v410 = vadd.f32 %v313, %v405
  %411 = vrot.lane.b32.xlu0 %v14, 111
  %v412 = vpop.permute.xlu0 %411
  %413 = vrot.lane.b32.xlu0 %v15, 111
  %v414 = vpop.permute.xlu0 %413
  %vm415 = vcmp.lt.s32.totalorder %v123, 111
  %v416 = vsel %vm415, %v412, %v414
  %v417 = vsel %vm415, %v414, %v412
  %s418 = scalar_lea.vmem %s1, 64
  %v419 = vld [vmem:[%s418] sm:$0xff]
  %v420 = vld [vmem:[%s418 + $0x8] sm:$0xff]
  %v422 = vsel %vm30, %v419, 0
  %v425 = vsel %vm30, %v420, 0
  %427 = vmatprep.subr.mxu0 %v417
  %428 = vmatpush1.msra.mxu0 %v416
  %429 = vmatprep.subr.mxu0 0.0
  %430 = vmatpush1.msra.mxu0 0.0
  %431 = vmatprep.subr.mxu0 0.0
  %432 = vmatpush1.msra.mxu0 0.0
  %433 = vmatprep.subr.mxu0 0.0
  %434 = vmatpush1.msra.mxu0 0.0
  %435 = vmatprep.subr.mxu0 0.0
  %436 = vmatpush1.msra.mxu0 0.0
  %437 = vmatprep.subr.mxu0 0.0
  %438 = vmatpush1.msra.mxu0 0.0
  %439 = vmatprep.subr.mxu0 0.0
  %440 = vmatpush1.msra.mxu0 0.0
  %441 = vmatprep.subr.mxu0 0.0
  %442 = vmatpush1.msra.mxu0 0.0
  %443 = vmatprep.subr.mxu0 0.0
  %444 = vmatpush1.msra.mxu0 0.0
  %445 = vmatprep.subr.mxu0 0.0
  %446 = vmatpush1.msra.mxu0 0.0
  %447 = vmatprep.subr.mxu0 0.0
  %448 = vmatpush1.msra.mxu0 0.0
  %449 = vmatprep.subr.mxu0 0.0
  %450 = vmatpush1.msra.mxu0 0.0
  %451 = vmatprep.subr.mxu0 0.0
  %452 = vmatpush1.msra.mxu0 0.0
  %453 = vmatprep.subr.mxu0 0.0
  %454 = vmatpush1.msra.mxu0 0.0
  %455 = vmatprep.subr.mxu0 0.0
  %456 = vmatpush1.msra.mxu0 0.0
  %457 = vmatprep.subr.mxu0 0.0
  %458 = vmatpush1.msra.mxu0 0.0
  %459 = vmatprep.subr.mxu0 0.0
  %460 = vmatpush1.msra.mxu0 0.0
  %461 = vmatprep.subr.mxu0 0.0
  %462 = vmatpush1.msra.mxu0 0.0
  %463 = vmatprep.subr.mxu0 0.0
  %464 = vmatpush1.msra.mxu0 0.0
  %465 = vmatprep.subr.mxu0 0.0
  %466 = vmatpush1.msra.mxu0 0.0
  %467 = vmatprep.subr.mxu0 0.0
  %468 = vmatpush1.msra.mxu0 0.0
  %469 = vmatprep.subr.mxu0 0.0
  %470 = vmatpush1.msra.mxu0 0.0
  %471 = vmatprep.subr.mxu0 0.0
  %472 = vmatpush1.msra.mxu0 0.0
  %473 = vmatprep.subr.mxu0 0.0
  %474 = vmatpush1.msra.mxu0 0.0
  %475 = vmatprep.subr.mxu0 0.0
  %476 = vmatpush1.msra.mxu0 0.0
  %477 = vmatprep.subr.mxu0 0.0
  %478 = vmatpush1.msra.mxu0 0.0
  %479 = vmatprep.subr.mxu0 0.0
  %480 = vmatpush1.msra.mxu0 0.0
  %481 = vmatprep.subr.mxu0 0.0
  %482 = vmatpush1.msra.mxu0 0.0
  %483 = vmatprep.subr.mxu0 0.0
  %484 = vmatpush1.msra.mxu0 0.0
  %485 = vmatprep.subr.mxu0 0.0
  %486 = vmatpush1.msra.mxu0 0.0
  %487 = vmatprep.subr.mxu0 0.0
  %488 = vmatpush1.msra.mxu0 0.0
  %489 = vmatprep.subr.mxu0 0.0
  %490 = vmatpush1.msra.mxu0 0.0
  %491 = vmatprep.mubr.f32.mxu0 0.0
  %492 = vmatmul.mubr.f32.gmra.mrb[0].mxu0 %v422
  %v493 = vpop.f32.mrb[0].mxu0
  %v494 = vadd.f32 0.0, %v493
  %v495 = vpop.f32.mrb[0].mxu0
  %v496 = vadd.f32 0.0, %v495
  %497 = vmatprep.mubr.f32.mxu0 0.0
  %498 = vmatmul.mubr.f32.gmra.mrb[0].mxu0 %v425
  %v499 = vpop.f32.mrb[0].mxu0
  %v500 = vadd.f32 0.0, %v499
  %v501 = vpop.f32.mrb[0].mxu0
  %v502 = vadd.f32 0.0, %v501
  %503 = vdwg.mxu0
  %v504 = vadd.f32 %v407, %v494
  %v505 = vadd.f32 %v408, %v496
  %v506 = vadd.f32 %v409, %v500
  %v507 = vadd.f32 %v410, %v502
  %508 = vrot.lane.b32.xlu0 %v14, 110
  %v509 = vpop.permute.xlu0 %508
  %510 = vrot.lane.b32.xlu0 %v15, 110
  %v511 = vpop.permute.xlu0 %510
  %vm512 = vcmp.lt.s32.totalorder %v123, 110
  %v513 = vsel %vm512, %v509, %v511
  %v514 = vsel %vm512, %v511, %v509
  %s515 = scalar_lea.vmem %s1, 80
  %v516 = vld [vmem:[%s515] sm:$0xff]
  %v517 = vld [vmem:[%s515 + $0x8] sm:$0xff]
  %v519 = vsel %vm30, %v516, 0
  %v522 = vsel %vm30, %v517, 0
  %524 = vmatprep.subr.mxu0 %v514
  %525 = vmatpush1.msra.mxu0 %v513
  %526 = vmatprep.subr.mxu0 0.0
  %527 = vmatpush1.msra.mxu0 0.0
  %528 = vmatprep.subr.mxu0 0.0
  %529 = vmatpush1.msra.mxu0 0.0
  %530 = vmatprep.subr.mxu0 0.0
  %531 = vmatpush1.msra.mxu0 0.0
  %532 = vmatprep.subr.mxu0 0.0
  %533 = vmatpush1.msra.mxu0 0.0
  %534 = vmatprep.subr.mxu0 0.0
  %535 = vmatpush1.msra.mxu0 0.0
  %536 = vmatprep.subr.mxu0 0.0
  %537 = vmatpush1.msra.mxu0 0.0
  %538 = vmatprep.subr.mxu0 0.0
  %539 = vmatpush1.msra.mxu0 0.0
  %540 = vmatprep.subr.mxu0 0.0
  %541 = vmatpush1.msra.mxu0 0.0
  %542 = vmatprep.subr.mxu0 0.0
  %543 = vmatpush1.msra.mxu0 0.0
  %544 = vmatprep.subr.mxu0 0.0
  %545 = vmatpush1.msra.mxu0 0.0
  %546 = vmatprep.subr.mxu0 0.0
  %547 = vmatpush1.msra.mxu0 0.0
  %548 = vmatprep.subr.mxu0 0.0
  %549 = vmatpush1.msra.mxu0 0.0
  %550 = vmatprep.subr.mxu0 0.0
  %551 = vmatpush1.msra.mxu0 0.0
  %552 = vmatprep.subr.mxu0 0.0
  %553 = vmatpush1.msra.mxu0 0.0
  %554 = vmatprep.subr.mxu0 0.0
  %555 = vmatpush1.msra.mxu0 0.0
  %556 = vmatprep.subr.mxu0 0.0
  %557 = vmatpush1.msra.mxu0 0.0
  %558 = vmatprep.subr.mxu0 0.0
  %559 = vmatpush1.msra.mxu0 0.0
  %560 = vmatprep.subr.mxu0 0.0
  %561 = vmatpush1.msra.mxu0 0.0
  %562 = vmatprep.subr.mxu0 0.0
  %563 = vmatpush1.msra.mxu0 0.0
  %564 = vmatprep.subr.mxu0 0.0
  %565 = vmatpush1.msra.mxu0 0.0
  %566 = vmatprep.subr.mxu0 0.0
  %567 = vmatpush1.msra.mxu0 0.0
  %568 = vmatprep.subr.mxu0 0.0
  %569 = vmatpush1.msra.mxu0 0.0
  %570 = vmatprep.subr.mxu0 0.0
  %571 = vmatpush1.msra.mxu0 0.0
  %572 = vmatprep.subr.mxu0 0.0
  %573 = vmatpush1.msra.mxu0 0.0
  %574 = vmatprep.subr.mxu0 0.0
  %575 = vmatpush1.msra.mxu0 0.0
  %576 = vmatprep.subr.mxu0 0.0
  %577 = vmatpush1.msra.mxu0 0.0
  %578 = vmatprep.subr.mxu0 0.0
  %579 = vmatpush1.msra.mxu0 0.0
  %580 = vmatprep.subr.mxu0 0.0
  %581 = vmatpush1.msra.mxu0 0.0
  %582 = vmatprep.subr.mxu0 0.0
  %583 = vmatpush1.msra.mxu0 0.0
  %584 = vmatprep.subr.mxu0 0.0
  %585 = vmatpush1.msra.mxu0 0.0
  %586 = vmatprep.subr.mxu0 0.0
  %587 = vmatpush1.msra.mxu0 0.0
  %588 = vmatprep.mubr.f32.mxu0 0.0
  %589 = vmatmul.mubr.f32.gmra.mrb[0].mxu0 %v519
  %v590 = vpop.f32.mrb[0].mxu0
  %v591 = vadd.f32 0.0, %v590
  %v592 = vpop.f32.mrb[0].mxu0
  %v593 = vadd.f32 0.0, %v592
  %594 = vmatprep.mubr.f32.mxu0 0.0
  %595 = vmatmul.mubr.f32.gmra.mrb[0].mxu0 %v522
  %v596 = vpop.f32.mrb[0].mxu0
  %v597 = vadd.f32 0.0, %v596
  %v598 = vpop.f32.mrb[0].mxu0
  %v599 = vadd.f32 0.0, %v598
  %600 = vdwg.mxu0
  %v601 = vadd.f32 %v504, %v591
  %v602 = vadd.f32 %v505, %v593
  %v603 = vadd.f32 %v506, %v597
  %v604 = vadd.f32 %v507, %v599
  %605 = vrot.lane.b32.xlu0 %v14, 96
  %v606 = vpop.permute.xlu0 %605
  %607 = vrot.lane.b32.xlu0 %v15, 96
  %v608 = vpop.permute.xlu0 %607
  %vm609 = vcmp.lt.s32.totalorder %v123, 96
  %v610 = vsel %vm609, %v606, %v608
  %v611 = vsel %vm609, %v608, %v606
  %s612 = scalar_lea.vmem %s1, 96
  %v613 = vld [vmem:[%s612] sm:$0xff]
  %v614 = vld [vmem:[%s612 + $0x8] sm:$0xff]
  %v616 = vsel %vm30, %v613, 0
  %v619 = vsel %vm30, %v614, 0
  %621 = vmatprep.subr.mxu0 %v611
  %622 = vmatpush1.msra.mxu0 %v610
  %623 = vmatprep.subr.mxu0 0.0
  %624 = vmatpush1.msra.mxu0 0.0
  %625 = vmatprep.subr.mxu0 0.0
  %626 = vmatpush1.msra.mxu0 0.0
  %627 = vmatprep.subr.mxu0 0.0
  %628 = vmatpush1.msra.mxu0 0.0
  %629 = vmatprep.subr.mxu0 0.0
  %630 = vmatpush1.msra.mxu0 0.0
  %631 = vmatprep.subr.mxu0 0.0
  %632 = vmatpush1.msra.mxu0 0.0
  %633 = vmatprep.subr.mxu0 0.0
  %634 = vmatpush1.msra.mxu0 0.0
  %635 = vmatprep.subr.mxu0 0.0
  %636 = vmatpush1.msra.mxu0 0.0
  %637 = vmatprep.subr.mxu0 0.0
  %638 = vmatpush1.msra.mxu0 0.0
  %639 = vmatprep.subr.mxu0 0.0
  %640 = vmatpush1.msra.mxu0 0.0
  %641 = vmatprep.subr.mxu0 0.0
  %642 = vmatpush1.msra.mxu0 0.0
  %643 = vmatprep.subr.mxu0 0.0
  %644 = vmatpush1.msra.mxu0 0.0
  %645 = vmatprep.subr.mxu0 0.0
  %646 = vmatpush1.msra.mxu0 0.0
  %647 = vmatprep.subr.mxu0 0.0
  %648 = vmatpush1.msra.mxu0 0.0
  %649 = vmatprep.subr.mxu0 0.0
  %650 = vmatpush1.msra.mxu0 0.0
  %651 = vmatprep.subr.mxu0 0.0
  %652 = vmatpush1.msra.mxu0 0.0
  %653 = vmatprep.subr.mxu0 0.0
  %654 = vmatpush1.msra.mxu0 0.0
  %655 = vmatprep.subr.mxu0 0.0
  %656 = vmatpush1.msra.mxu0 0.0
  %657 = vmatprep.subr.mxu0 0.0
  %658 = vmatpush1.msra.mxu0 0.0
  %659 = vmatprep.subr.mxu0 0.0
  %660 = vmatpush1.msra.mxu0 0.0
  %661 = vmatprep.subr.mxu0 0.0
  %662 = vmatpush1.msra.mxu0 0.0
  %663 = vmatprep.subr.mxu0 0.0
  %664 = vmatpush1.msra.mxu0 0.0
  %665 = vmatprep.subr.mxu0 0.0
  %666 = vmatpush1.msra.mxu0 0.0
  %667 = vmatprep.subr.mxu0 0.0
  %668 = vmatpush1.msra.mxu0 0.0
  %669 = vmatprep.subr.mxu0 0.0
  %670 = vmatpush1.msra.mxu0 0.0
  %671 = vmatprep.subr.mxu0 0.0
  %672 = vmatpush1.msra.mxu0 0.0
  %673 = vmatprep.subr.mxu0 0.0
  %674 = vmatpush1.msra.mxu0 0.0
  %675 = vmatprep.subr.mxu0 0.0
  %676 = vmatpush1.msra.mxu0 0.0
  %677 = vmatprep.subr.mxu0 0.0
  %678 = vmatpush1.msra.mxu0 0.0
  %679 = vmatprep.subr.mxu0 0.0
  %680 = vmatpush1.msra.mxu0 0.0
  %681 = vmatprep.subr.mxu0 0.0
  %682 = vmatpush1.msra.mxu0 0.0
  %683 = vmatprep.subr.mxu0 0.0
  %684 = vmatpush1.msra.mxu0 0.0
  %685 = vmatprep.mubr.f32.mxu0 0.0
  %686 = vmatmul.mubr.f32.gmra.mrb[0].mxu0 %v616
  %v687 = vpop.f32.mrb[0].mxu0
  %v688 = vadd.f32 0.0, %v687
  %v689 = vpop.f32.mrb[0].mxu0
  %v690 = vadd.f32 0.0, %v689
  %691 = vmatprep.mubr.f32.mxu0 0.0
  %692 = vmatmul.mubr.f32.gmra.mrb[0].mxu0 %v619
  %v693 = vpop.f32.mrb[0].mxu0
  %v694 = vadd.f32 0.0, %v693
  %v695 = vpop.f32.mrb[0].mxu0
  %v696 = vadd.f32 0.0, %v695
  %697 = vdwg.mxu0
  %v698 = vadd.f32 %v601, %v688
  %v699 = vadd.f32 %v602, %v690
  %v700 = vadd.f32 %v603, %v694
  %v701 = vadd.f32 %v604, %v696
  %702 = vrot.lane.b32.xlu0 %v14, 95
  %v703 = vpop.permute.xlu0 %702
  %704 = vrot.lane.b32.xlu0 %v15, 95
  %v705 = vpop.permute.xlu0 %704
  %vm706 = vcmp.lt.s32.totalorder %v123, 95
  %v707 = vsel %vm706, %v703, %v705
  %v708 = vsel %vm706, %v705, %v703
  %s709 = scalar_lea.vmem %s1, 112
  %v710 = vld [vmem:[%s709] sm:$0xff]
  %v711 = vld [vmem:[%s709 + $0x8] sm:$0xff]
  %v713 = vsel %vm30, %v710, 0
  %v716 = vsel %vm30, %v711, 0
  %718 = vmatprep.subr.mxu0 %v708
  %719 = vmatpush1.msra.mxu0 %v707
  %720 = vmatprep.subr.mxu0 0.0
  %721 = vmatpush1.msra.mxu0 0.0
  %722 = vmatprep.subr.mxu0 0.0
  %723 = vmatpush1.msra.mxu0 0.0
  %724 = vmatprep.subr.mxu0 0.0
  %725 = vmatpush1.msra.mxu0 0.0
  %726 = vmatprep.subr.mxu0 0.0
  %727 = vmatpush1.msra.mxu0 0.0
  %728 = vmatprep.subr.mxu0 0.0
  %729 = vmatpush1.msra.mxu0 0.0
  %730 = vmatprep.subr.mxu0 0.0
  %731 = vmatpush1.msra.mxu0 0.0
  %732 = vmatprep.subr.mxu0 0.0
  %733 = vmatpush1.msra.mxu0 0.0
  %734 = vmatprep.subr.mxu0 0.0
  %735 = vmatpush1.msra.mxu0 0.0
  %736 = vmatprep.subr.mxu0 0.0
  %737 = vmatpush1.msra.mxu0 0.0
  %738 = vmatprep.subr.mxu0 0.0
  %739 = vmatpush1.msra.mxu0 0.0
  %740 = vmatprep.subr.mxu0 0.0
  %741 = vmatpush1.msra.mxu0 0.0
  %742 = vmatprep.subr.mxu0 0.0
  %743 = vmatpush1.msra.mxu0 0.0
  %744 = vmatprep.subr.mxu0 0.0
  %745 = vmatpush1.msra.mxu0 0.0
  %746 = vmatprep.subr.mxu0 0.0
  %747 = vmatpush1.msra.mxu0 0.0
  %748 = vmatprep.subr.mxu0 0.0
  %749 = vmatpush1.msra.mxu0 0.0
  %750 = vmatprep.subr.mxu0 0.0
  %751 = vmatpush1.msra.mxu0 0.0
  %752 = vmatprep.subr.mxu0 0.0
  %753 = vmatpush1.msra.mxu0 0.0
  %754 = vmatprep.subr.mxu0 0.0
  %755 = vmatpush1.msra.mxu0 0.0
  %756 = vmatprep.subr.mxu0 0.0
  %757 = vmatpush1.msra.mxu0 0.0
  %758 = vmatprep.subr.mxu0 0.0
  %759 = vmatpush1.msra.mxu0 0.0
  %760 = vmatprep.subr.mxu0 0.0
  %761 = vmatpush1.msra.mxu0 0.0
  %762 = vmatprep.subr.mxu0 0.0
  %763 = vmatpush1.msra.mxu0 0.0
  %764 = vmatprep.subr.mxu0 0.0
  %765 = vmatpush1.msra.mxu0 0.0
  %766 = vmatprep.subr.mxu0 0.0
  %767 = vmatpush1.msra.mxu0 0.0
  %768 = vmatprep.subr.mxu0 0.0
  %769 = vmatpush1.msra.mxu0 0.0
  %770 = vmatprep.subr.mxu0 0.0
  %771 = vmatpush1.msra.mxu0 0.0
  %772 = vmatprep.subr.mxu0 0.0
  %773 = vmatpush1.msra.mxu0 0.0
  %774 = vmatprep.subr.mxu0 0.0
  %775 = vmatpush1.msra.mxu0 0.0
  %776 = vmatprep.subr.mxu0 0.0
  %777 = vmatpush1.msra.mxu0 0.0
  %778 = vmatprep.subr.mxu0 0.0
  %779 = vmatpush1.msra.mxu0 0.0
  %780 = vmatprep.subr.mxu0 0.0
  %781 = vmatpush1.msra.mxu0 0.0
  %782 = vmatprep.mubr.f32.mxu0 0.0
  %783 = vmatmul.mubr.f32.gmra.mrb[0].mxu0 %v713
  %v784 = vpop.f32.mrb[0].mxu0
  %v785 = vadd.f32 0.0, %v784
  %v786 = vpop.f32.mrb[0].mxu0
  %v787 = vadd.f32 0.0, %v786
  %788 = vmatprep.mubr.f32.mxu0 0.0
  %789 = vmatmul.mubr.f32.gmra.mrb[0].mxu0 %v716
  %v790 = vpop.f32.mrb[0].mxu0
  %v791 = vadd.f32 0.0, %v790
  %v792 = vpop.f32.mrb[0].mxu0
  %v793 = vadd.f32 0.0, %v792
  %794 = vdwg.mxu0
  %v795 = vadd.f32 %v698, %v785
  %v796 = vadd.f32 %v699, %v787
  %v797 = vadd.f32 %v700, %v791
  %v798 = vadd.f32 %v701, %v793
  %799 = vrot.lane.b32.xlu0 %v14, 94
  %v800 = vpop.permute.xlu0 %799
  %801 = vrot.lane.b32.xlu0 %v15, 94
  %v802 = vpop.permute.xlu0 %801
  %vm803 = vcmp.lt.s32.totalorder %v123, 94
  %v804 = vsel %vm803, %v800, %v802
  %v805 = vsel %vm803, %v802, %v800
  %s806 = scalar_lea.vmem %s1, 128
  %v807 = vld [vmem:[%s806] sm:$0xff]
  %v808 = vld [vmem:[%s806 + $0x8] sm:$0xff]
  %v810 = vsel %vm30, %v807, 0
  %v813 = vsel %vm30, %v808, 0
  %815 = vmatprep.subr.mxu0 %v805
  %816 = vmatpush1.msra.mxu0 %v804
  %817 = vmatprep.subr.mxu0 0.0
  %818 = vmatpush1.msra.mxu0 0.0
  %819 = vmatprep.subr.mxu0 0.0
  %820 = vmatpush1.msra.mxu0 0.0
  %821 = vmatprep.subr.mxu0 0.0
  %822 = vmatpush1.msra.mxu0 0.0
  %823 = vmatprep.subr.mxu0 0.0
  %824 = vmatpush1.msra.mxu0 0.0
  %825 = vmatprep.subr.mxu0 0.0
  %826 = vmatpush1.msra.mxu0 0.0
  %827 = vmatprep.subr.mxu0 0.0
  %828 = vmatpush1.msra.mxu0 0.0
  %829 = vmatprep.subr.mxu0 0.0
  %830 = vmatpush1.msra.mxu0 0.0
  %831 = vmatprep.subr.mxu0 0.0
  %832 = vmatpush1.msra.mxu0 0.0
  %833 = vmatprep.subr.mxu0 0.0
  %834 = vmatpush1.msra.mxu0 0.0
  %835 = vmatprep.subr.mxu0 0.0
  %836 = vmatpush1.msra.mxu0 0.0
  %837 = vmatprep.subr.mxu0 0.0
  %838 = vmatpush1.msra.mxu0 0.0
  %839 = vmatprep.subr.mxu0 0.0
  %840 = vmatpush1.msra.mxu0 0.0
  %841 = vmatprep.subr.mxu0 0.0
  %842 = vmatpush1.msra.mxu0 0.0
  %843 = vmatprep.subr.mxu0 0.0
  %844 = vmatpush1.msra.mxu0 0.0
  %845 = vmatprep.subr.mxu0 0.0
  %846 = vmatpush1.msra.mxu0 0.0
  %847 = vmatprep.subr.mxu0 0.0
  %848 = vmatpush1.msra.mxu0 0.0
  %849 = vmatprep.subr.mxu0 0.0
  %850 = vmatpush1.msra.mxu0 0.0
  %851 = vmatprep.subr.mxu0 0.0
  %852 = vmatpush1.msra.mxu0 0.0
  %853 = vmatprep.subr.mxu0 0.0
  %854 = vmatpush1.msra.mxu0 0.0
  %855 = vmatprep.subr.mxu0 0.0
  %856 = vmatpush1.msra.mxu0 0.0
  %857 = vmatprep.subr.mxu0 0.0
  %858 = vmatpush1.msra.mxu0 0.0
  %859 = vmatprep.subr.mxu0 0.0
  %860 = vmatpush1.msra.mxu0 0.0
  %861 = vmatprep.subr.mxu0 0.0
  %862 = vmatpush1.msra.mxu0 0.0
  %863 = vmatprep.subr.mxu0 0.0
  %864 = vmatpush1.msra.mxu0 0.0
  %865 = vmatprep.subr.mxu0 0.0
  %866 = vmatpush1.msra.mxu0 0.0
  %867 = vmatprep.subr.mxu0 0.0
  %868 = vmatpush1.msra.mxu0 0.0
  %869 = vmatprep.subr.mxu0 0.0
  %870 = vmatpush1.msra.mxu0 0.0
  %871 = vmatprep.subr.mxu0 0.0
  %872 = vmatpush1.msra.mxu0 0.0
  %873 = vmatprep.subr.mxu0 0.0
  %874 = vmatpush1.msra.mxu0 0.0
  %875 = vmatprep.subr.mxu0 0.0
  %876 = vmatpush1.msra.mxu0 0.0
  %877 = vmatprep.subr.mxu0 0.0
  %878 = vmatpush1.msra.mxu0 0.0
  %879 = vmatprep.mubr.f32.mxu0 0.0
  %880 = vmatmul.mubr.f32.gmra.mrb[0].mxu0 %v810
  %v881 = vpop.f32.mrb[0].mxu0
  %v882 = vadd.f32 0.0, %v881
  %v883 = vpop.f32.mrb[0].mxu0
  %v884 = vadd.f32 0.0, %v883
  %885 = vmatprep.mubr.f32.mxu0 0.0
  %886 = vmatmul.mubr.f32.gmra.mrb[0].mxu0 %v813
  %v887 = vpop.f32.mrb[0].mxu0
  %v888 = vadd.f32 0.0, %v887
  %v889 = vpop.f32.mrb[0].mxu0
  %v890 = vadd.f32 0.0, %v889
  %891 = vdwg.mxu0
  %v892 = vadd.f32 %v795, %v882
  %v893 = vadd.f32 %v796, %v884
  %v894 = vadd.f32 %v797, %v888
  %v895 = vadd.f32 %v798, %v890
  %896 = vst [vmem:[%s3] sm:$0xff] %v892
  %897 = vst [vmem:[%s3 + $0x8] sm:$0xff] %v893
  %898 = vst [vmem:[%s3 + $0x10] sm:$0xff] %v894
  %899 = vst [vmem:[%s3 + $0x18] sm:$0xff] %v895
  // Predicated region
  $region14: #{model_forward.1} parent=0 // pred_check
    _
  $region15: #{model_forward.1} parent=0 // pred_check_branch
    %901 = sbr.rel (0) target = $region17
  $region16: #{model_forward.1} parent=0 // pred_region
    _
  $region17: #{model_forward.1} parent=0 // pred_fallthru
    _
  // Predicated region
  $region18: #{model_forward.1} parent=0 // pred_check
    _
  $region19: #{model_forward.1} parent=0 // pred_check_branch
    %903 = sbr.rel (0) target = $region21
  $region20: #{model_forward.1} parent=0 // pred_region
    _
  $region21: #{model_forward.1} parent=0 // pred_fallthru
    _

</llo_original>
